<compile_context>
chip_gen: v6e
topology: v6e:2x2x1
jax: 0.10.0
libtpu: 0.0.40
codegen_flags: <defaults>
</compile_context>

<pallas_src>
import functools

import jax
import jax.numpy as jnp
from jax import lax
from jax.experimental import pallas as pl
from jax.experimental.pallas import tpu as pltpu


def _cdiv(a, b):
    return -(-a // b)


def _round_down(x, m):
    return (x // m) * m


def _round_up(x, m):
    return _cdiv(x, m) * m


def _compiler_params(semantics, est_bytes):
    # Explicit scoped-VMEM limit: v5e's default is only 16 MiB, so raise it
    # once tiles reach ~2 MiB; keep well under v7x's 64 MiB physical VMEM.
    return pltpu.CompilerParams(
        dimension_semantics=semantics,
        vmem_limit_bytes=int(min(112 << 20, max(32 << 20, 2 * est_bytes))))


# ---------------------------------------------------------------------------
# Kernel 1: per-softmax-row statistics via online (flash-style) logsumexp over
# class blocks.  Used for both layouts (the class axis of the block is axis 1
# in both cases):
#   2-D : x block (tr, tc)      -> stat blocks (tr, 1)
#   3-D : x block (1, tc, thw)  -> stat blocks (1, 1, thw)
#   lse     = logsumexp_c x
#   rowterm = sum_c x - C * lse   ( = sum_c log_softmax(x) per softmax row )
# ---------------------------------------------------------------------------
def _stats_kernel(x_ref, lse_ref, rowterm_ref, m_sc, s_sc, xsum_sc, *,
                  n_classes, class_tile, mask_classes, class_grid_axis):
    k = pl.program_id(class_grid_axis)

    @pl.when(k == 0)
    def _():
        m_sc[...] = jnp.full_like(m_sc, -jnp.inf)
        s_sc[...] = jnp.zeros_like(s_sc)
        xsum_sc[...] = jnp.zeros_like(xsum_sc)

    x = x_ref[...].astype(jnp.float32)
    if mask_classes:
        # Class-axis tail block: ignore out-of-range classes.
        cls = k * class_tile + lax.broadcasted_iota(jnp.int32, x.shape, 1)
        valid = cls < n_classes
        x_mx = jnp.where(valid, x, -jnp.inf)     # exp(-inf - m) == 0
        x_sm = jnp.where(valid, x, 0.0)
    else:
        x_mx = x
        x_sm = x

    m_prev = m_sc[...]
    m_new = jnp.maximum(m_prev, jnp.max(x_mx, axis=1, keepdims=True))
    s_sc[...] = (s_sc[...] * jnp.exp(m_prev - m_new)
                 + jnp.sum(jnp.exp(x_mx - m_new), axis=1, keepdims=True))
    xsum_sc[...] = xsum_sc[...] + jnp.sum(x_sm, axis=1, keepdims=True)
    m_sc[...] = m_new

    @pl.when(k == pl.num_programs(class_grid_axis) - 1)
    def _():
        lse = m_sc[...] + jnp.log(s_sc[...])
        lse_ref[...] = lse
        # NOTE: xsum - C*lse can lose a little precision to cancellation for
        # huge-magnitude logits; f32 accumulation keeps it inside tolerance.
        rowterm_ref[...] = xsum_sc[...] - jnp.float32(n_classes) * lse


# ---------------------------------------------------------------------------
# Kernel 2: pure load -> exp -> store stream.  The global scalar L has been
# folded into lse on the host ( lse_adj = lse - log(-L) ), so:
#   out = -softmax(x) * L = exp(x - lse_adj)
# ---------------------------------------------------------------------------
def _scale_softmax_kernel(x_ref, lse_adj_ref, o_ref):
    x = x_ref[...].astype(jnp.float32)
    o_ref[...] = jnp.exp(x - lse_adj_ref[...]).astype(o_ref.dtype)


def _fold_total(lse, rowterm):
    # L = sum(rowterm) <= 0.  out = -softmax * L = exp(x - (lse - log(-L))).
    # If L == 0 (only possible when C == 1), out is exactly 0 -> lse_adj=+inf.
    total = jnp.sum(rowterm)
    neg_total = -total
    log_neg = jnp.log(jnp.where(neg_total > 0, neg_total, 1.0))
    return jnp.where(neg_total > 0, lse - log_neg, jnp.inf).astype(jnp.float32)


# ---------------------------------------------------------------------------
# 2-D path: (N, C) logits, classes on the lane axis.
# ---------------------------------------------------------------------------
def _forward_2d(x, *, block_rows, block_cols, donate):
    n, c = x.shape
    itemsize = jnp.dtype(x.dtype).itemsize
    row_align = max(8, 32 // itemsize)           # 8 f32, 16 bf16, 32 int8/fp8

    # Class tile (lanes): multiple of 128, or the full class count; target
    # ~2 MiB blocks (the measured mem-bound sweet spot), never the full dim
    # fallback for huge / non-factorable C.
    pref_cols = block_cols if block_cols is not None else max(
        128, _round_down((2 << 20) // (256 * itemsize), 128))
    tc = c if c <= pref_cols else max(128, _round_down(pref_cols, 128))

    # Row tile: vreg-dense multiple of the dtype's sublane packing.
    pref_rows = max(row_align, _round_down(block_rows, row_align))
    tr = n if n <= pref_rows else pref_rows
    # v7x has 2 TensorCores: keep >= 2 row blocks so the "parallel" row axis
    # can be sharded across them (harmless elsewhere).
    if _cdiv(n, tr) < 2 and n >= 2 * row_align:
        tr = _round_up(_cdiv(n, 2), row_align)

    grid = (_cdiv(n, tr), _cdiv(c, tc))
    mask_classes = (c % tc) != 0
    blk = tr * tc * itemsize

    lse, rowterm = pl.pallas_call(
        functools.partial(_stats_kernel, n_classes=c, class_tile=tc,
                          mask_classes=mask_classes, class_grid_axis=1),
        out_shape=(jax.ShapeDtypeStruct((n, 1), jnp.float32),
                   jax.ShapeDtypeStruct((n, 1), jnp.float32)),
        grid_spec=pltpu.PrefetchScalarGridSpec(
            num_scalar_prefetch=0,
            grid=grid,
            in_specs=[pl.BlockSpec((tr, tc), lambda i, j: (i, j))],
            out_specs=[pl.BlockSpec((tr, 1), lambda i, j: (i, 0)),
                       pl.BlockSpec((tr, 1), lambda i, j: (i, 0))],
            scratch_shapes=[pltpu.VMEM((tr, 1), jnp.float32)] * 3),
        compiler_params=_compiler_params(
            ("parallel", "arbitrary"), 2 * blk + 7 * tr * 128 * 4),
    )(x)

    lse_adj = _fold_total(lse, rowterm)

    out = pl.pallas_call(
        _scale_softmax_kernel,
        out_shape=jax.ShapeDtypeStruct((n, c), x.dtype),
        grid_spec=pltpu.PrefetchScalarGridSpec(
            num_scalar_prefetch=0,
            grid=grid,
            in_specs=[pl.BlockSpec((tr, tc), lambda i, j: (i, j)),
                      pl.BlockSpec((tr, 1), lambda i, j: (i, 0))],
            out_specs=pl.BlockSpec((tr, tc), lambda i, j: (i, j))),
        compiler_params=_compiler_params(
            ("parallel", "parallel"), 4 * blk + 2 * tr * 128 * 4),
        input_output_aliases=({0: 0} if donate else {}),
    )(x, lse_adj)
    return out


# ---------------------------------------------------------------------------
# N-D path: (N, C, HW) with softmax over axis 1.  Spatial (HW) stays on the
# lane axis (lane-dense even for tiny class counts); the class axis lives on
# sublanes and is the online reduction.
# ---------------------------------------------------------------------------
def _forward_nd(x, *, block_classes, block_spatial, donate):
    nb, c, hw = x.shape
    itemsize = jnp.dtype(x.dtype).itemsize

    pref_hw = block_spatial if block_spatial is not None else 2048
    thw = hw if hw <= pref_hw else max(128, _round_down(pref_hw, 128))

    pref_c = block_classes if block_classes is not None else max(
        8, _round_down((2 << 20) // (thw * itemsize), 8))
    tc = c if c <= pref_c else max(8, _round_down(pref_c, 8))

    mask_classes = (c % tc) != 0
    blk = tc * thw * itemsize

    grid1 = (nb, _cdiv(hw, thw), _cdiv(c, tc))          # class axis last
    lse, rowterm = pl.pallas_call(
        functools.partial(_stats_kernel, n_classes=c, class_tile=tc,
                          mask_classes=mask_classes, class_grid_axis=2),
        out_shape=(jax.ShapeDtypeStruct((nb, 1, hw), jnp.float32),
                   jax.ShapeDtypeStruct((nb, 1, hw), jnp.float32)),
        grid_spec=pltpu.PrefetchScalarGridSpec(
            num_scalar_prefetch=0,
            grid=grid1,
            in_specs=[pl.BlockSpec((1, tc, thw), lambda b, h, k: (b, k, h))],
            out_specs=[pl.BlockSpec((1, 1, thw), lambda b, h, k: (b, 0, h)),
                       pl.BlockSpec((1, 1, thw), lambda b, h, k: (b, 0, h))],
            scratch_shapes=[pltpu.VMEM((1, 1, thw), jnp.float32)] * 3),
        compiler_params=_compiler_params(
            ("parallel", "parallel", "arbitrary"), 2 * blk + 7 * 8 * thw * 4),
    )(x)

    lse_adj = _fold_total(lse, rowterm)

    grid2 = (nb, _cdiv(c, tc), _cdiv(hw, thw))           # fully elementwise
    out = pl.pallas_call(
        _scale_softmax_kernel,
        out_shape=jax.ShapeDtypeStruct((nb, c, hw), x.dtype),
        grid_spec=pltpu.PrefetchScalarGridSpec(
            num_scalar_prefetch=0,
            grid=grid2,
            in_specs=[pl.BlockSpec((1, tc, thw), lambda b, k, h: (b, k, h)),
                      pl.BlockSpec((1, 1, thw), lambda b, k, h: (b, 0, h))],
            out_specs=pl.BlockSpec((1, tc, thw), lambda b, k, h: (b, k, h))),
        compiler_params=_compiler_params(
            ("parallel", "parallel", "parallel"), 4 * blk + 2 * 8 * thw * 4),
        input_output_aliases=({0: 0} if donate else {}),
    )(x, lse_adj)
    return out


# ---------------------------------------------------------------------------
# Public wrapper (forward of complementary_CE).
# ---------------------------------------------------------------------------
def complementary_ce_forward(pred_score, target_score=None, *,
                             ignore_index=-100, weight=None,
                             block_rows=256, block_cols=None,
                             block_classes=None, block_spatial=None,
                             donate_pred=False):
    """Returns -softmax(pred_score, dim=1) * log_softmax(pred_score, dim=1).sum()
    with the same shape/dtype as pred_score.  target_score / ignore_index /
    weight are accepted for API parity but unused (as in the PyTorch forward).
    Set donate_pred=True only when the caller can donate pred_score's buffer.
    """
    del target_score, ignore_index, weight    # unused by the reference forward

    if pred_score.ndim == 2:
        return _forward_2d(pred_score, block_rows=block_rows,
                           block_cols=block_cols, donate=donate_pred)

    # softmax over dim=1: fold trailing spatial dims into a single lane axis.
    # (N, C, H, W) -> (N, C, H*W) is a contiguous (free) reshape — no moveaxis
    # transposes, so no extra HBM passes and small C stays lane-dense.
    n, c = pred_score.shape[0], pred_score.shape[1]
    hw = 1
    for d in pred_score.shape[2:]:
        hw *= int(d)
    x3d = pred_score.reshape(n, c, hw)
    out3d = _forward_nd(x3d, block_classes=block_classes,
                        block_spatial=block_spatial, donate=donate_pred)
    return out3d.reshape(pred_score.shape)


# ---------------------------------------------------------------------------
# Pure-JAX reference for a silent correctness check.
# ---------------------------------------------------------------------------
def _reference(pred_score):
    x = pred_score.astype(jnp.float32)
    p = jax.nn.softmax(x, axis=1)
    logp_sum = jnp.sum(jax.nn.log_softmax(x, axis=1))
    return (-p * logp_sum).astype(pred_score.dtype)


if __name__ == "__main__":
    key = jax.random.PRNGKey(0)
    k1, k2, k3, k4 = jax.random.split(key, 4)

    # Case 1: 2-D logits with non-divisible tiles -> exercises cdiv grid,
    # row tail, class-tail masking and the online logsumexp over 2 class
    # blocks (small shapes; tile overrides force multiple blocks).
    n, c = 40, 160
    pred = jax.random.normal(k1, (n, c), dtype=jnp.float32) * 2.0
    tgt = jax.nn.softmax(jax.random.normal(k2, (n, c), dtype=jnp.float32), -1)
    out = complementary_ce_forward(pred, tgt, block_rows=16, block_cols=128)
    out = jax.block_until_ready(out)
    ref = _reference(pred)
    assert out.shape == pred.shape and out.dtype == pred.dtype
    assert jnp.allclose(out, ref, rtol=5e-4, atol=1e-2), \
        float(jnp.max(jnp.abs(out - ref)))

    # Case 2: 4-D scores (N, C, H, W) with softmax over dim=1 (no transposes).
    pred4 = jax.random.normal(k3, (2, 4, 16, 16), dtype=jnp.float32)
    out4 = jax.block_until_ready(complementary_ce_forward(pred4, None))
    ref4 = _reference(pred4)
    assert out4.shape == pred4.shape and out4.dtype == pred4.dtype
    assert jnp.allclose(out4, ref4, rtol=5e-4, atol=1e-2)

    # Case 3: 4-D with non-divisible class AND spatial tails (segmentation-like
    # C=19), forcing masked class blocks and a partial lane-tail spatial block.
    pred5 = jax.random.normal(k4, (2, 19, 16, 18), dtype=jnp.float32)
    out5 = jax.block_until_ready(
        complementary_ce_forward(pred5, None, block_classes=8, block_spatial=128))
    ref5 = _reference(pred5)
    assert jnp.allclose(out5, ref5, rtol=5e-4, atol=1e-2)

    print("KERNEL_OK")
</pallas_src>

<mosaic_0001>
module attributes {stable_mosaic.version = 11 : i64} {
  func.func @_stats_kernel(%arg0: i32, %arg1: i32, %arg2: memref<16x128xf32, #tpu.memory_space<vmem>>, %arg3: memref<16x1xf32, #tpu.memory_space<vmem>>, %arg4: memref<16x1xf32, #tpu.memory_space<vmem>>, %arg5: memref<16x1xf32, #tpu.memory_space<vmem>>, %arg6: memref<16x1xf32, #tpu.memory_space<vmem>>, %arg7: memref<16x1xf32, #tpu.memory_space<vmem>>) attributes {dimension_semantics = [#tpu.dimension_semantics<parallel>, #tpu.dimension_semantics<arbitrary>], iteration_bounds = array<i64: 3, 2>, scalar_prefetch = 0 : i64, scratch_operands = 3 : i64, tpu.core_type = #tpu.core_type<tc>, window_params = [{transform_indices = @transform_0, window_bounds = array<i64: 16, 128>}, {transform_indices = @transform_1, window_bounds = array<i64: 16, 1>}, {transform_indices = @transform_2, window_bounds = array<i64: 16, 1>}]} {
    %c0_i32 = arith.constant 0 : i32
    %0 = arith.cmpi eq, %arg1, %c0_i32 : i32
    %1 = arith.extui %0 : i1 to i32
    %c0_i32_0 = arith.constant 0 : i32
    %2 = arith.cmpi ne, %1, %c0_i32_0 : i32
    scf.if %2 {
      %cst_19 = arith.constant 0xFF800000 : f32
      %38 = vector.broadcast %cst_19 : f32 to vector<16x1xf32>
      %c0_20 = arith.constant 0 : index
      %c0_21 = arith.constant 0 : index
      %39 = vector.load %arg5[%c0_20, %c0_21] : memref<16x1xf32, #tpu.memory_space<vmem>>, vector<16x1xf32>
      tpu.vector_store %arg5[%c0_20, %c0_21], %38 {strides = array<i32>} : memref<16x1xf32, #tpu.memory_space<vmem>>, vector<16x1xf32>,
      %cst_22 = arith.constant 0.000000e+00 : f32
      %40 = vector.broadcast %cst_22 : f32 to vector<16x1xf32>
      %c0_23 = arith.constant 0 : index
      %c0_24 = arith.constant 0 : index
      %41 = vector.load %arg6[%c0_23, %c0_24] : memref<16x1xf32, #tpu.memory_space<vmem>>, vector<16x1xf32>
      tpu.vector_store %arg6[%c0_23, %c0_24], %40 {strides = array<i32>} : memref<16x1xf32, #tpu.memory_space<vmem>>, vector<16x1xf32>,
      %cst_25 = arith.constant 0.000000e+00 : f32
      %42 = vector.broadcast %cst_25 : f32 to vector<16x1xf32>
      %c0_26 = arith.constant 0 : index
      %c0_27 = arith.constant 0 : index
      %43 = vector.load %arg7[%c0_26, %c0_27] : memref<16x1xf32, #tpu.memory_space<vmem>>, vector<16x1xf32>
      tpu.vector_store %arg7[%c0_26, %c0_27], %42 {strides = array<i32>} : memref<16x1xf32, #tpu.memory_space<vmem>>, vector<16x1xf32>,
    } else {
    }
    %c0 = arith.constant 0 : index
    %c0_1 = arith.constant 0 : index
    %3 = vector.load %arg2[%c0, %c0_1] : memref<16x128xf32, #tpu.memory_space<vmem>>, vector<16x128xf32>
    %c128_i32 = arith.constant 128 : i32
    %4 = arith.muli %arg1, %c128_i32 : i32
    %5 = tpu.iota {dimensions = array<i32: 1>} : vector<16x128xi32>
    %6 = vector.broadcast %4 : i32 to vector<16x128xi32>
    %7 = arith.addi %6, %5 : vector<16x128xi32>
    %c160_i32 = arith.constant 160 : i32
    %8 = vector.broadcast %c160_i32 : i32 to vector<16x128xi32>
    %9 = arith.cmpi slt, %7, %8 : vector<16x128xi32>
    %cst = arith.constant 0xFF800000 : f32
    %10 = vector.broadcast %cst : f32 to vector<16x128xf32>
    %11 = arith.select %9, %3, %10 : vector<16x128xi1>, vector<16x128xf32>
    %cst_2 = arith.constant 0.000000e+00 : f32
    %12 = vector.broadcast %cst_2 : f32 to vector<16x128xf32>
    %13 = arith.select %9, %3, %12 : vector<16x128xi1>, vector<16x128xf32>
    %c0_3 = arith.constant 0 : index
    %c0_4 = arith.constant 0 : index
    %14 = vector.load %arg5[%c0_3, %c0_4] : memref<16x1xf32, #tpu.memory_space<vmem>>, vector<16x1xf32>
    %cst_5 = arith.constant dense<0xFF800000> : vector<16xf32>
    %15 = vector.multi_reduction <maximumf>, %11, %cst_5 [1] : vector<16x128xf32> to vector<16xf32>
    %16 = vector.shape_cast %15 : vector<16xf32> to vector<16x1xf32>
    %17 = arith.maximumf %14, %16 : vector<16x1xf32>
    %c0_6 = arith.constant 0 : index
    %c0_7 = arith.constant 0 : index
    %18 = vector.load %arg6[%c0_6, %c0_7] : memref<16x1xf32, #tpu.memory_space<vmem>>, vector<16x1xf32>
    %19 = arith.subf %14, %17 : vector<16x1xf32>
    %20 = math.exp %19 : vector<16x1xf32>
    %21 = arith.mulf %18, %20 : vector<16x1xf32>
    %22 = vector.broadcast %17 : vector<16x1xf32> to vector<16x128xf32>
    %23 = arith.subf %11, %22 : vector<16x128xf32>
    %24 = math.exp %23 : vector<16x128xf32>
    %cst_8 = arith.constant dense<0.000000e+00> : vector<16xf32>
    %25 = vector.multi_reduction <add>, %24, %cst_8 [1] : vector<16x128xf32> to vector<16xf32>
    %26 = vector.shape_cast %25 : vector<16xf32> to vector<16x1xf32>
    %27 = arith.addf %21, %26 : vector<16x1xf32>
    %c0_9 = arith.constant 0 : index
    %c0_10 = arith.constant 0 : index
    %28 = vector.load %arg6[%c0_9, %c0_10] : memref<16x1xf32, #tpu.memory_space<vmem>>, vector<16x1xf32>
    tpu.vector_store %arg6[%c0_9, %c0_10], %27 {strides = array<i32>} : memref<16x1xf32, #tpu.memory_space<vmem>>, vector<16x1xf32>,
    %c0_11 = arith.constant 0 : index
    %c0_12 = arith.constant 0 : index
    %29 = vector.load %arg7[%c0_11, %c0_12] : memref<16x1xf32, #tpu.memory_space<vmem>>, vector<16x1xf32>
    %cst_13 = arith.constant dense<0.000000e+00> : vector<16xf32>
    %30 = vector.multi_reduction <add>, %13, %cst_13 [1] : vector<16x128xf32> to vector<16xf32>
    %31 = vector.shape_cast %30 : vector<16xf32> to vector<16x1xf32>
    %32 = arith.addf %29, %31 : vector<16x1xf32>
    %c0_14 = arith.constant 0 : index
    %c0_15 = arith.constant 0 : index
    %33 = vector.load %arg7[%c0_14, %c0_15] : memref<16x1xf32, #tpu.memory_space<vmem>>, vector<16x1xf32>
    tpu.vector_store %arg7[%c0_14, %c0_15], %32 {strides = array<i32>} : memref<16x1xf32, #tpu.memory_space<vmem>>, vector<16x1xf32>,
    %c0_16 = arith.constant 0 : index
    %c0_17 = arith.constant 0 : index
    %34 = vector.load %arg5[%c0_16, %c0_17] : memref<16x1xf32, #tpu.memory_space<vmem>>, vector<16x1xf32>
    tpu.vector_store %arg5[%c0_16, %c0_17], %17 {strides = array<i32>} : memref<16x1xf32, #tpu.memory_space<vmem>>, vector<16x1xf32>,
    %c1_i32 = arith.constant 1 : i32
    %35 = arith.cmpi eq, %arg1, %c1_i32 : i32
    %36 = arith.extui %35 : i1 to i32
    %c0_i32_18 = arith.constant 0 : i32
    %37 = arith.cmpi ne, %36, %c0_i32_18 : i32
    scf.if %37 {
      %c0_19 = arith.constant 0 : index
      %c0_20 = arith.constant 0 : index
      %38 = vector.load %arg5[%c0_19, %c0_20] : memref<16x1xf32, #tpu.memory_space<vmem>>, vector<16x1xf32>
      %c0_21 = arith.constant 0 : index
      %c0_22 = arith.constant 0 : index
      %39 = vector.load %arg6[%c0_21, %c0_22] : memref<16x1xf32, #tpu.memory_space<vmem>>, vector<16x1xf32>
      %40 = math.log %39 : vector<16x1xf32>
      %41 = arith.addf %38, %40 : vector<16x1xf32>
      %c0_23 = arith.constant 0 : index
      %c0_24 = arith.constant 0 : index
      %42 = vector.load %arg3[%c0_23, %c0_24] : memref<16x1xf32, #tpu.memory_space<vmem>>, vector<16x1xf32>
      tpu.vector_store %arg3[%c0_23, %c0_24], %41 {strides = array<i32>} : memref<16x1xf32, #tpu.memory_space<vmem>>, vector<16x1xf32>,
      %c0_25 = arith.constant 0 : index
      %c0_26 = arith.constant 0 : index
      %43 = vector.load %arg7[%c0_25, %c0_26] : memref<16x1xf32, #tpu.memory_space<vmem>>, vector<16x1xf32>
      %cst_27 = arith.constant 1.600000e+02 : f32
      %44 = vector.broadcast %cst_27 : f32 to vector<16x1xf32>
      %45 = arith.mulf %44, %41 : vector<16x1xf32>
      %46 = arith.subf %43, %45 : vector<16x1xf32>
      %c0_28 = arith.constant 0 : index
      %c0_29 = arith.constant 0 : index
      %47 = vector.load %arg4[%c0_28, %c0_29] : memref<16x1xf32, #tpu.memory_space<vmem>>, vector<16x1xf32>
      tpu.vector_store %arg4[%c0_28, %c0_29], %46 {strides = array<i32>} : memref<16x1xf32, #tpu.memory_space<vmem>>, vector<16x1xf32>,
    } else {
    }
    return
  }
  func.func @transform_0(%arg0: i32, %arg1: i32) -> (i32, i32) {
    %c0_i32 = arith.constant 0 : i32
    return %arg0, %arg1 : i32, i32
  }
  func.func @transform_1(%arg0: i32, %arg1: i32) -> (i32, i32) {
    %c0_i32 = arith.constant 0 : i32
    %c0_i32_0 = arith.constant 0 : i32
    return %arg0, %c0_i32 : i32, i32
  }
  func.func @transform_2(%arg0: i32, %arg1: i32) -> (i32, i32) {
    %c0_i32 = arith.constant 0 : i32
    %c0_i32_0 = arith.constant 0 : i32
    return %arg0, %c0_i32 : i32, i32
  }
}

</mosaic_0001>

<llo_original>
// kernel: tpu_custom_call.1
$region0: #{tpu_custom_call.1}
  #allocation0 [shape = 'u32[]', space=smem, size = 0x4, offset = 0x4, fixed_abs, tag = 'smem constant byte address 0x4 - core index']
  #allocation1 [shape = 'u32[144,128]{1,0:T(1,128)}', space=vmem, size = 0x12000, scoped, tag = 'internal scratch']
  #allocation2 [shape = 'f32[16,1]{1,0:T(8,128)}', space=vmem, size = 0x2000, scoped, tag = 'scratch operand']
  #allocation3 [shape = 'f32[16,1]{1,0:T(8,128)}', space=vmem, size = 0x2000, scoped, tag = 'scratch operand']
  #allocation4 [shape = 'f32[16,1]{1,0:T(8,128)}', space=vmem, size = 0x2000, scoped, tag = 'scratch operand']
  %s0 = inlined_call_operand.hbm [shape: f32[40,160], index: 0, kind: input, shape index: {}]
  %s1 = inlined_call_operand.vmem [shape: f32[40,1], index: 1, kind: output, shape index: {0}]
  %s2 = inlined_call_operand.vmem [shape: f32[40,1], index: 2, kind: output, shape index: {1}]
  %3 = xla_tuple %s1, %s2
  %s4 = sld [smem:[#allocation0]]
  $region153: #{tpu_custom_call.1} parent=0
    _
  %s6 = ssub.s32 1, %s4
  %s7 = scalar_select 0, %s6, %s4
  $region1: #{tpu_custom_call.1} parent=0
    #allocation5 [shape = 'u8[16384]{0}', space=vmem, size = 0x4000, scoped, tag = 'input window, operand 0']
    #allocation6 [shape = 's32[2]{0}', space=sflag, size = 0x8, scoped, tag = 'scoped memory for tpu_custom_call.1']
    #allocation7 [shape = 'u8[16384]{0}', space=vmem, size = 0x4000, scoped, tag = 'output window, operand 0']
    #allocation8 [shape = 'u8[16384]{0}', space=vmem, size = 0x4000, scoped, tag = 'output window, operand 1']
    %8 = vsyncpa [#allocation6], 0
    %s9 = scalar_lea.sflag [#allocation6], 1
    %10 = vsyncpa %s9, 0
    loop: start=0, step=1, limit=8
    $region2: #{tpu_custom_call.1} parent=1 // loop_pre_header
      _
    $region3: #{tpu_custom_call.1} parent=1 // loop_header
      %s12 = sphi 0, %s16
      %p13 = scmp.ge.s32.totalorder %s12, 8
      %s19 = sphi 0, %s31
      %s20 = sphi 0, %s27
      %s21 = sphi 0, %s19
      %s22 = sphi 0, %s20
      %s23 = sphi 0, %s21
      %s24 = sphi 0, %s22
      %s36 = sphi 0, %s38
      %s39 = sphi 0, %s36
      %s40 = sphi 0, %s39
      %s56 = sphi 0, %s40
      %s62 = sphi 0, %s64
      %s65 = sphi 0, %s62
      %s66 = sphi 0, %s65
      %s82 = sphi 0, %s66
      %s88 = sphi 0, %s90
      %s91 = sphi 0, %s88
      %s92 = sphi 0, %s91
      %s108 = sphi 0, %s92
    $region4: #{tpu_custom_call.1} parent=1 // loop_header_branch
      %15 = sbr.rel (%p13) target = $region8
    $region5: #{tpu_custom_call.1} parent=1 // loop_body
      %s17 = ssub.s32 %s12, 1
      %s18 = ssub.s32 %s12, 2
      %s25 = sadd.s32 1, %s20
      %p26 = scmp.ge.s32.totalorder %s25, 2
      %s27 = scalar_select %p26, 0, %s25
      %s28 = sadd.s32 1, %s19
      %s29 = scalar_select %p26, %s28, %s19
      %p30 = scmp.ge.s32.totalorder %s29, 3
      %s31 = scalar_select %p30, 0, %s29
      %s32 = ssub.s32 %s19, %s31
      %s33 = ssub.s32 %s20, %s27
      %s34 = sor.u32 %s32, %s33
      %p35 = scmp.eq.s32.totalorder %s34, 0
      %s37 = sadd.s32 %s36, 1
      %s38 = scalar_select %p35, %s36, %s37
      %p41 = pneg %p35
      %p42 = scmp.eq.s32.totalorder %s12, 5
      %p43 = por %p41, %p42
      %p44 = scmp.ne.s32.totalorder %s36, %s39
      %p45 = scmp.eq.s32.totalorder %s12, 0
      %p46 = por %p44, %p45
      %p47 = scmp.ne.s32.totalorder %s36, %s39
      %p48 = scmp.eq.s32.totalorder %s17, 5
      %p49 = por %p47, %p48
      %p50 = scmp.ne.s32.totalorder %s39, %s40
      %p51 = scmp.eq.s32.totalorder %s17, 0
      %p52 = por %p50, %p51
      %p53 = scmp.ne.s32.totalorder %s39, %s40
      %p54 = scmp.eq.s32.totalorder %s18, 5
      %p55 = por %p53, %p54
      %p57 = scmp.ne.s32.totalorder %s40, %s56
      %p58 = scmp.eq.s32.totalorder %s18, 0
      %p59 = por %p57, %p58
      %s60 = ssub.s32 %s19, %s31
      %p61 = scmp.eq.s32.totalorder %s60, 0
      %s63 = sadd.s32 %s62, 1
      %s64 = scalar_select %p61, %s62, %s63
      %p67 = pneg %p61
      %p68 = scmp.eq.s32.totalorder %s12, 5
      %p69 = por %p67, %p68
      %p70 = scmp.ne.s32.totalorder %s62, %s65
      %p71 = scmp.eq.s32.totalorder %s12, 0
      %p72 = por %p70, %p71
      %p73 = scmp.ne.s32.totalorder %s62, %s65
      %p74 = scmp.eq.s32.totalorder %s17, 5
      %p75 = por %p73, %p74
      %p76 = scmp.ne.s32.totalorder %s65, %s66
      %p77 = scmp.eq.s32.totalorder %s17, 0
      %p78 = por %p76, %p77
      %p79 = scmp.ne.s32.totalorder %s65, %s66
      %p80 = scmp.eq.s32.totalorder %s18, 5
      %p81 = por %p79, %p80
      %p83 = scmp.ne.s32.totalorder %s66, %s82
      %p84 = scmp.eq.s32.totalorder %s18, 0
      %p85 = por %p83, %p84
      %s86 = ssub.s32 %s19, %s31
      %p87 = scmp.eq.s32.totalorder %s86, 0
      %s89 = sadd.s32 %s88, 1
      %s90 = scalar_select %p87, %s88, %s89
      %p93 = pneg %p87
      %p94 = scmp.eq.s32.totalorder %s12, 5
      %p95 = por %p93, %p94
      %p96 = scmp.ne.s32.totalorder %s88, %s91
      %p97 = scmp.eq.s32.totalorder %s12, 0
      %p98 = por %p96, %p97
      %p99 = scmp.ne.s32.totalorder %s88, %s91
      %p100 = scmp.eq.s32.totalorder %s17, 5
      %p101 = por %p99, %p100
      %p102 = scmp.ne.s32.totalorder %s91, %s92
      %p103 = scmp.eq.s32.totalorder %s17, 0
      %p104 = por %p102, %p103
      %p105 = scmp.ne.s32.totalorder %s91, %s92
      %p106 = scmp.eq.s32.totalorder %s18, 5
      %p107 = por %p105, %p106
      %p109 = scmp.ne.s32.totalorder %s92, %s108
      %p110 = scmp.eq.s32.totalorder %s18, 0
      %p111 = por %p109, %p110
      %p112 = scmp.le.s32.totalorder 1, %s12
      %p113 = scmp.lt.s32.totalorder %s12, 7
      %p114 = pnand %p112, %p113
      %p115 = pneg %p114
      // Predicated region
      $region9: #{tpu_custom_call.1} parent=5 // pred_check
        _
      $region10: #{tpu_custom_call.1} parent=5 // pred_check_branch
        %117 = sbr.rel (%p114) target = $region12
      $region11: #{tpu_custom_call.1} parent=5 // pred_region
        %s118 = ssub.s32 %s12, 1
      $region12: #{tpu_custom_call.1} parent=5 // pred_fallthru
        _
      %p119 = scmp.lt.s32.totalorder %s12, 6
      // Predicated region
      $region13: #{tpu_custom_call.1} parent=5 // pred_check
        %p120 = pneg %p119
      $region14: #{tpu_custom_call.1} parent=5 // pred_check_branch
        %122 = sbr.rel (%p120) target = $region16
      $region15: #{tpu_custom_call.1} parent=5 // pred_region
        // Predicated region
        $region17: #{tpu_custom_call.1} parent=15 // pred_check
          %p123 = pneg %p46
        $region18: #{tpu_custom_call.1} parent=15 // pred_check_branch
          %125 = sbr.rel (%p123) target = $region20
        $region19: #{tpu_custom_call.1} parent=15 // pred_region
          %s126 = sand.u32 %s36, 1
          %s127 = scalar_lea.sflag [#allocation6], %s126
          %s128 = sand.u32 %s36, 1
          %s129 = smul.addr %s128, 16
          %s130 = scalar_lea.vmem [#allocation5], %s129
          %s131 = smul.u32 2, %s19
          %s132 = ssub.s32 5, %s131
          %p133 = scmp.lt.s32.totalorder %s132, 2
          %s134 = scalar_select %p133, %s132, 2
          %s135 = smul.u32 128, %s134
          %s137 = ssub.s32 256, %s135
          %138 = vsyncadd %s127, %s137
          %p139 = scmp.ne.s32.totalorder 0, %s135
          %s140 = smul.addr %s131, 2
          %s141 = sadd.s32 %s20, %s140
          %s142 = smul.addr %s141, 128
          %s143 = scalar_lea.hbm %s0, %s142
          %s144 = smul.u32 8, %s134
          %s145 = sshll.u32 %s130, 4
          %s146 = int_to_ptr.vmem [resolvable:$true] %s145
          %s147 = sshll.u32 %s144, 4
          %151 = dma.hbm_to_vmem [thread:$0]  (%p139), %s143, %s147, %s146, %s127, 256, 128, 8
        $region20: #{tpu_custom_call.1} parent=15 // pred_fallthru
          _
      $region16: #{tpu_custom_call.1} parent=5 // pred_fallthru
        _
      %p152 = scmp.le.s32.totalorder 1, %s12
      %p153 = scmp.lt.s32.totalorder %s12, 7
      %p154 = pnand %p152, %p153
      %p155 = pneg %p154
      // Predicated region
      $region21: #{tpu_custom_call.1} parent=5 // pred_check
        _
      $region22: #{tpu_custom_call.1} parent=5 // pred_check_branch
        %157 = sbr.rel (%p154) target = $region24
      $region23: #{tpu_custom_call.1} parent=5 // pred_region
        %s158 = ssub.s32 %s12, 1
        %s159 = sand.u32 %s39, 1
        %s160 = scalar_lea.sflag [#allocation6], %s159
        %s161 = sand.u32 %s39, 1
        %s162 = smul.addr %s161, 16
        %s163 = scalar_lea.vmem [#allocation5], %s162
        // Predicated region
        $region25: #{tpu_custom_call.1} parent=23 // pred_check
          %p164 = pneg %p52
        $region26: #{tpu_custom_call.1} parent=23 // pred_check_branch
          %166 = sbr.rel (%p164) target = $region28
        $region27: #{tpu_custom_call.1} parent=23 // pred_region
          %167 = dma.done %s160, 256
        $region28: #{tpu_custom_call.1} parent=23 // pred_fallthru
          _
        %s168 = sand.u32 %s39, 1
        %s169 = scalar_lea.sflag [#allocation6], %s168
        %s170 = sand.u32 %s39, 1
        %s171 = smul.addr %s170, 16
        %s172 = scalar_lea.vmem [#allocation5], %s171
        %p173 = pneg %p52
        %p174 = pneg %p49
        %p175 = pneg %p78
        %p176 = pneg %p75
        %s177 = sand.u32 %s65, 1
        %s178 = sand.u32 %s65, 1
        %s179 = smul.addr %s178, 16
        %s180 = scalar_lea.vmem [#allocation7], %s179
        %p181 = pneg %p104
        %p182 = pneg %p101
        %s183 = sand.u32 %s91, 1
        %s184 = sand.u32 %s91, 1
        %s185 = smul.addr %s184, 16
        %s186 = scalar_lea.vmem [#allocation8], %s185
        %s187 = smul.u32 2, %s21
        %s188 = ssub.s32 5, %s187
        %p189 = scmp.lt.s32.totalorder %s188, 2
        %s190 = scalar_select %p189, %s188, 2
        %s191 = smul.u32 128, %s190
        %s192 = smul.u32 2, %s21
        %s193 = ssub.s32 5, %s192
        %p194 = scmp.lt.s32.totalorder %s193, 2
        %s195 = scalar_select %p194, %s193, 2
        %s196 = smul.u32 128, %s195
        %s197 = smul.u32 2, %s21
        %s198 = ssub.s32 5, %s197
        %p199 = scmp.lt.s32.totalorder %s198, 2
        %s200 = scalar_select %p199, %s198, 2
        %s201 = smul.u32 128, %s200
        %p202 = scmp.eq.s32.totalorder %s22, 0
        // Predicated region
        $region29: #{tpu_custom_call.1} parent=23 // pred_check
          %p203 = pneg %p202
        $region30: #{tpu_custom_call.1} parent=23 // pred_check_branch
          %205 = sbr.rel (%p203) target = $region32
        $region31: #{tpu_custom_call.1} parent=23 // pred_region
          %vm206 = vcmask 7168
          %207 = vst.msk [vmem:[#allocation2] sm:$0xff] %vm206, -inf
          %208 = vst.msk [vmem:[#allocation2 + $0x8] sm:$0xff] %vm206, -inf
          %209 = vst.msk [vmem:[#allocation3] sm:$0xff] %vm206, 0.0
          %210 = vst.msk [vmem:[#allocation3 + $0x8] sm:$0xff] %vm206, 0.0
          %211 = vst.msk [vmem:[#allocation4] sm:$0xff] %vm206, 0.0
          %212 = vst.msk [vmem:[#allocation4 + $0x8] sm:$0xff] %vm206, 0.0
        $region32: #{tpu_custom_call.1} parent=23 // pred_fallthru
          _
        %v213 = vld [vmem:[%s163] sm:$0xff]
        %v214 = vld [vmem:[%s163 + $0x8] sm:$0xff]
        %s215 = smul.u32 %s22, 128
        %v216 = vlaneseq
        %v217 = vand.u32 %v216, 127
        %v218 = vstv %s215
        %v219 = vadd.s32 %v218, %v217
        %vm220 = vcmp.lt.s32.totalorder %v219, 160
        %v221 = vsel %vm220, %v213, -inf
        %v222 = vsel %vm220, %v214, -inf
        %v223 = vsel %vm220, %v213, 0.0
        %v224 = vsel %vm220, %v214, 0.0
        %v225 = vld [vmem:[#allocation2] sm:$0xff]
        %v226 = vld [vmem:[#allocation2 + $0x8] sm:$0xff]
        %227 = vmax.xlane.f32.xlu0 %v221
        %v228 = vpop.xlane.xlu0 %227
        %229 = vmax.xlane.f32.xlu0 %v222
        %v230 = vpop.xlane.xlu0 %229
        %v231 = vmax.f32 %v225, %v228
        %v232 = vmax.f32 %v226, %v230
        %v233 = vld [vmem:[#allocation3] sm:$0xff]
        %v234 = vld [vmem:[#allocation3 + $0x8] sm:$0xff]
        %v235 = vsub.f32 %v225, %v231
        %v236 = vsub.f32 %v226, %v232
        %v237 = vmul.f32 %v235, 1.442695
        %v238 = vpow.pop %v237
        %v239 = vmul.f32 %v236, 1.442695
        %v240 = vpow.pop %v239
        %v241 = vmul.f32 %v233, %v238
        %v242 = vmul.f32 %v234, %v240
        %244 = vset.pattern.permute.xlu0 0
        %245 = vperm.xlu0 %244, %v231
        %v246 = vpop.permute.xlu0 %245
        %249 = vset.pattern.permute.xlu0 0
        %250 = vperm.xlu0 %249, %v232
        %v251 = vpop.permute.xlu0 %250
        %v253 = vsub.f32 %v221, %v246
        %v254 = vsub.f32 %v222, %v251
        %v255 = vmul.f32 %v253, 1.442695
        %v256 = vpow.pop %v255
        %v257 = vmul.f32 %v254, 1.442695
        %v258 = vpow.pop %v257
        %259 = vadd.xlane.f32.xlu0 %v256
        %v260 = vpop.xlane.xlu0 %259
        %261 = vadd.xlane.f32.xlu0 %v258
        %v262 = vpop.xlane.xlu0 %261
        %v263 = vadd.f32 %v241, %v260
        %v264 = vadd.f32 %v242, %v262
        %vm265 = vcmask 7168
        %266 = vst.msk [vmem:[#allocation3] sm:$0xff] %vm265, %v263
        %267 = vst.msk [vmem:[#allocation3 + $0x8] sm:$0xff] %vm265, %v264
        %v268 = vld [vmem:[#allocation4] sm:$0xff]
        %v269 = vld [vmem:[#allocation4 + $0x8] sm:$0xff]
        %270 = vadd.xlane.f32.xlu0 %v223
        %v271 = vpop.xlane.xlu0 %270
        %272 = vadd.xlane.f32.xlu0 %v224
        %v273 = vpop.xlane.xlu0 %272
        %v274 = vadd.f32 %v268, %v271
        %v275 = vadd.f32 %v269, %v273
        %276 = vst.msk [vmem:[#allocation4] sm:$0xff] %vm265, %v274
        %277 = vst.msk [vmem:[#allocation4 + $0x8] sm:$0xff] %vm265, %v275
        %278 = vst.msk [vmem:[#allocation2] sm:$0xff] %vm265, %v231
        %279 = vst.msk [vmem:[#allocation2 + $0x8] sm:$0xff] %vm265, %v232
        %p280 = scmp.eq.s32.totalorder %s22, 1
        // Predicated region
        $region33: #{tpu_custom_call.1} parent=23 // pred_check
          %p281 = pneg %p280
        $region34: #{tpu_custom_call.1} parent=23 // pred_check_branch
          %283 = sbr.rel (%p281) target = $region36
        $region35: #{tpu_custom_call.1} parent=23 // pred_region
          %v284 = vld [vmem:[#allocation2] sm:$0xff]
          %v285 = vld [vmem:[#allocation2 + $0x8] sm:$0xff]
          %v286 = vld [vmem:[#allocation3] sm:$0xff]
          %v287 = vld [vmem:[#allocation3 + $0x8] sm:$0xff]
          %v288 = vlog2.pop %v286
          %v289 = vmul.f32 %v288, 0.6931472
          %v290 = vlog2.pop %v287
          %v291 = vmul.f32 %v290, 0.6931472
          %v292 = vadd.f32 %v284, %v289
          %v293 = vadd.f32 %v285, %v291
          %294 = vst.msk [vmem:[%s180] sm:$0xff] %vm265, %v292
          %295 = vst.msk [vmem:[%s180 + $0x8] sm:$0xff] %vm265, %v293
          %v296 = vld [vmem:[#allocation4] sm:$0xff]
          %v297 = vld [vmem:[#allocation4 + $0x8] sm:$0xff]
          %v298 = vmul.f32 %v292, 160.0
          %v299 = vmul.f32 %v293, 160.0
          %v300 = vsub.f32 %v296, %v298
          %v301 = vsub.f32 %v297, %v299
          %302 = vst.msk [vmem:[%s186] sm:$0xff] %vm265, %v300
          %303 = vst.msk [vmem:[%s186 + $0x8] sm:$0xff] %vm265, %v301
        $region36: #{tpu_custom_call.1} parent=23 // pred_fallthru
          _
        %s304 = sand.u32 %s65, 1
        %s305 = sand.u32 %s65, 1
        %s306 = smul.addr %s305, 16
        %s307 = scalar_lea.vmem [#allocation7], %s306
        %s308 = sand.u32 %s91, 1
        %s309 = sand.u32 %s91, 1
        %s310 = smul.addr %s309, 16
        %s311 = scalar_lea.vmem [#allocation8], %s310
        // Predicated region
        $region37: #{tpu_custom_call.1} parent=23 // pred_check
          %p312 = pneg %p75
        $region38: #{tpu_custom_call.1} parent=23 // pred_check_branch
          %314 = sbr.rel (%p312) target = $region40
        $region39: #{tpu_custom_call.1} parent=23 // pred_region
          %s315 = smul.u32 2, %s21
          %s316 = ssub.s32 5, %s315
          %p317 = scmp.lt.s32.totalorder %s316, 2
          %s318 = scalar_select %p317, %s316, 2
          %s319 = smul.u32 128, %s318
          %p320 = scmp.ne.s32.totalorder 0, %s319
          %s321 = smul.addr %s315, 8
          %s322 = scalar_lea.vmem %s1, %s321
          // Predicated region
          $region41: #{tpu_custom_call.1} parent=39 // pred_check
            %p323 = pneg %p320
          $region42: #{tpu_custom_call.1} parent=39 // pred_check_branch
            %325 = sbr.rel (%p323) target = $region44
          $region43: #{tpu_custom_call.1} parent=39 // pred_region
            // Predicated region
            $region45: #{tpu_custom_call.1} parent=43 // pred_check
              _
            $region46: #{tpu_custom_call.1} parent=43 // pred_check_branch
              %327 = sbr.rel (0) target = $region48
            $region47: #{tpu_custom_call.1} parent=43 // pred_region
              // Predicated region
              $region67: #{tpu_custom_call.1} parent=47 // pred_check
                _
              $region68: #{tpu_custom_call.1} parent=47 // pred_check_branch
                %379 = sbr.rel (0) target = $region70
              $region69: #{tpu_custom_call.1} parent=47 // pred_region
                %s380 = sshrl.u32 %s318, 1
                // While loop
                $region71: #{tpu_custom_call.1} parent=69 // loop_pre_header
                  _
                $region72: #{tpu_custom_call.1} parent=69 // loop_header
                  %s382 = sphi 0, %s384
                  %p383 = scmp.ge.s32.totalorder %s382, %s380
                  %s387 = sphi 0, %s396
                  %s388 = sphi %s307, %s399
                  %s389 = sphi %s322, %s400
                $region73: #{tpu_custom_call.1} parent=69 // loop_header_branch
                  %386 = sbr.rel (%p383) target = $region77
                $region74: #{tpu_custom_call.1} parent=69 // loop_body
                  %v390 = vld [vmem:[%s388] sm:$0xff]
                  %391 = vst [vmem:[%s389] sm:$0xff] %v390
                  %v392 = vld [vmem:[%s388 + $0x8] sm:$0xff]
                  %393 = vst [vmem:[%s389 + $0x8] sm:$0xff] %v392
                  %s394 = sadd.s32 1, %s387
                  %p395 = scmp.ge.s32.totalorder %s394, %s380
                  %s396 = scalar_select %p395, 0, %s394
                  %s397 = smul.u32 %s396, 16
                  %s398 = smul.u32 %s396, 16
                  %s399 = scalar_lea.vmem %s307, %s397 [#allocation7]
                  %s400 = scalar_lea.vmem %s322, %s398
                $region75: #{tpu_custom_call.1} parent=69 // loop_footer
                  %s384 = sadd.s32 %s382, 1
                $region76: #{tpu_custom_call.1} parent=69 // loop_footer_branch
                  %381 = sbr.rel target = $region72
                $region77: #{tpu_custom_call.1} parent=69 // loop_exit
                  _
                %s401 = sshrl.u32 %s318, 1
                %s402 = sand.u32 %s318, 1
                %s403 = smul.u32 %s401, 2
                %s404 = smul.u32 8, %s403
                %s405 = scalar_lea.vmem %s307, %s404 [#allocation7]
                %s406 = smul.u32 8, %s403
                %s407 = scalar_lea.vmem %s322, %s406
                // While loop
                $region78: #{tpu_custom_call.1} parent=69 // loop_pre_header
                  _
                $region79: #{tpu_custom_call.1} parent=69 // loop_header
                  %s409 = sphi 0, %s411
                  %p410 = scmp.ge.s32.totalorder %s409, %s402
                  %s414 = sphi 0, %s421
                  %s415 = sphi %s405, %s424
                  %s416 = sphi %s407, %s425
                $region80: #{tpu_custom_call.1} parent=69 // loop_header_branch
                  %413 = sbr.rel (%p410) target = $region84
                $region81: #{tpu_custom_call.1} parent=69 // loop_body
                  %v417 = vld [vmem:[%s415] sm:$0xff]
                  %418 = vst [vmem:[%s416] sm:$0xff] %v417
                  %s419 = sadd.s32 1, %s414
                  %p420 = scmp.ge.s32.totalorder %s419, %s402
                  %s421 = scalar_select %p420, 0, %s419
                  %s422 = smul.u32 %s421, 8
                  %s423 = smul.u32 %s421, 8
                  %s424 = scalar_lea.vmem %s405, %s422 [#allocation7]
                  %s425 = scalar_lea.vmem %s407, %s423
                $region82: #{tpu_custom_call.1} parent=69 // loop_footer
                  %s411 = sadd.s32 %s409, 1
                $region83: #{tpu_custom_call.1} parent=69 // loop_footer_branch
                  %408 = sbr.rel target = $region79
                $region84: #{tpu_custom_call.1} parent=69 // loop_exit
                  _
              $region70: #{tpu_custom_call.1} parent=47 // pred_fallthru
                _
              // Predicated region
              $region85: #{tpu_custom_call.1} parent=47 // pred_check
                _
              $region86: #{tpu_custom_call.1} parent=47 // pred_check_branch
                %427 = sbr.rel target = $region88
              $region87: #{tpu_custom_call.1} parent=47 // pred_region
                _
              $region88: #{tpu_custom_call.1} parent=47 // pred_fallthru
                _
            $region48: #{tpu_custom_call.1} parent=43 // pred_fallthru
              _
            // Predicated region
            $region49: #{tpu_custom_call.1} parent=43 // pred_check
              _
            $region50: #{tpu_custom_call.1} parent=43 // pred_check_branch
              %329 = sbr.rel target = $region52
            $region51: #{tpu_custom_call.1} parent=43 // pred_region
              %s331 = ssub.s32 256, 1
              %s332 = sshrl.u32 %s318, 1
              // While loop
              $region53: #{tpu_custom_call.1} parent=51 // loop_pre_header
                _
              $region54: #{tpu_custom_call.1} parent=51 // loop_header
                %s334 = sphi 0, %s336
                %p335 = scmp.ge.s32.totalorder %s334, %s332
                %s339 = sphi 0, %s348
                %s340 = sphi %s307, %s351
                %s341 = sphi %s322, %s352
              $region55: #{tpu_custom_call.1} parent=51 // loop_header_branch
                %338 = sbr.rel (%p335) target = $region59
              $region56: #{tpu_custom_call.1} parent=51 // loop_body
                %v342 = vld [vmem:[%s340] sm:%s331]
                %343 = vst [vmem:[%s341] sm:%s331] %v342
                %v344 = vld [vmem:[%s340 + $0x8] sm:%s331]
                %345 = vst [vmem:[%s341 + $0x8] sm:%s331] %v344
                %s346 = sadd.s32 1, %s339
                %p347 = scmp.ge.s32.totalorder %s346, %s332
                %s348 = scalar_select %p347, 0, %s346
                %s349 = smul.u32 %s348, 16
                %s350 = smul.u32 %s348, 16
                %s351 = scalar_lea.vmem %s307, %s349 [#allocation7]
                %s352 = scalar_lea.vmem %s322, %s350
              $region57: #{tpu_custom_call.1} parent=51 // loop_footer
                %s336 = sadd.s32 %s334, 1
              $region58: #{tpu_custom_call.1} parent=51 // loop_footer_branch
                %333 = sbr.rel target = $region54
              $region59: #{tpu_custom_call.1} parent=51 // loop_exit
                _
              %s353 = sshrl.u32 %s318, 1
              %s354 = sand.u32 %s318, 1
              %s355 = smul.u32 %s353, 2
              %s356 = smul.u32 8, %s355
              %s357 = scalar_lea.vmem %s307, %s356 [#allocation7]
              %s358 = smul.u32 8, %s355
              %s359 = scalar_lea.vmem %s322, %s358
              // While loop
              $region60: #{tpu_custom_call.1} parent=51 // loop_pre_header
                _
              $region61: #{tpu_custom_call.1} parent=51 // loop_header
                %s361 = sphi 0, %s363
                %p362 = scmp.ge.s32.totalorder %s361, %s354
                %s366 = sphi 0, %s373
                %s367 = sphi %s357, %s376
                %s368 = sphi %s359, %s377
              $region62: #{tpu_custom_call.1} parent=51 // loop_header_branch
                %365 = sbr.rel (%p362) target = $region66
              $region63: #{tpu_custom_call.1} parent=51 // loop_body
                %v369 = vld [vmem:[%s367] sm:%s331]
                %370 = vst [vmem:[%s368] sm:%s331] %v369
                %s371 = sadd.s32 1, %s366
                %p372 = scmp.ge.s32.totalorder %s371, %s354
                %s373 = scalar_select %p372, 0, %s371
                %s374 = smul.u32 %s373, 8
                %s375 = smul.u32 %s373, 8
                %s376 = scalar_lea.vmem %s357, %s374 [#allocation7]
                %s377 = scalar_lea.vmem %s359, %s375
              $region64: #{tpu_custom_call.1} parent=51 // loop_footer
                %s363 = sadd.s32 %s361, 1
              $region65: #{tpu_custom_call.1} parent=51 // loop_footer_branch
                %360 = sbr.rel target = $region61
              $region66: #{tpu_custom_call.1} parent=51 // loop_exit
                _
            $region52: #{tpu_custom_call.1} parent=43 // pred_fallthru
              _
          $region44: #{tpu_custom_call.1} parent=39 // pred_fallthru
            _
          %428 = vnop
        $region40: #{tpu_custom_call.1} parent=23 // pred_fallthru
          _
        // Predicated region
        $region89: #{tpu_custom_call.1} parent=23 // pred_check
          %p429 = pneg %p101
        $region90: #{tpu_custom_call.1} parent=23 // pred_check_branch
          %431 = sbr.rel (%p429) target = $region92
        $region91: #{tpu_custom_call.1} parent=23 // pred_region
          %s432 = smul.u32 2, %s21
          %s433 = ssub.s32 5, %s432
          %p434 = scmp.lt.s32.totalorder %s433, 2
          %s435 = scalar_select %p434, %s433, 2
          %s436 = smul.u32 128, %s435
          %p437 = scmp.ne.s32.totalorder 0, %s436
          %s438 = smul.addr %s432, 8
          %s439 = scalar_lea.vmem %s2, %s438
          // Predicated region
          $region93: #{tpu_custom_call.1} parent=91 // pred_check
            %p440 = pneg %p437
          $region94: #{tpu_custom_call.1} parent=91 // pred_check_branch
            %442 = sbr.rel (%p440) target = $region96
          $region95: #{tpu_custom_call.1} parent=91 // pred_region
            // Predicated region
            $region97: #{tpu_custom_call.1} parent=95 // pred_check
              _
            $region98: #{tpu_custom_call.1} parent=95 // pred_check_branch
              %444 = sbr.rel (0) target = $region100
            $region99: #{tpu_custom_call.1} parent=95 // pred_region
              // Predicated region
              $region119: #{tpu_custom_call.1} parent=99 // pred_check
                _
              $region120: #{tpu_custom_call.1} parent=99 // pred_check_branch
                %496 = sbr.rel (0) target = $region122
              $region121: #{tpu_custom_call.1} parent=99 // pred_region
                %s497 = sshrl.u32 %s435, 1
                // While loop
                $region123: #{tpu_custom_call.1} parent=121 // loop_pre_header
                  _
                $region124: #{tpu_custom_call.1} parent=121 // loop_header
                  %s499 = sphi 0, %s501
                  %p500 = scmp.ge.s32.totalorder %s499, %s497
                  %s504 = sphi 0, %s513
                  %s505 = sphi %s311, %s516
                  %s506 = sphi %s439, %s517
                $region125: #{tpu_custom_call.1} parent=121 // loop_header_branch
                  %503 = sbr.rel (%p500) target = $region129
                $region126: #{tpu_custom_call.1} parent=121 // loop_body
                  %v507 = vld [vmem:[%s505] sm:$0xff]
                  %508 = vst [vmem:[%s506] sm:$0xff] %v507
                  %v509 = vld [vmem:[%s505 + $0x8] sm:$0xff]
                  %510 = vst [vmem:[%s506 + $0x8] sm:$0xff] %v509
                  %s511 = sadd.s32 1, %s504
                  %p512 = scmp.ge.s32.totalorder %s511, %s497
                  %s513 = scalar_select %p512, 0, %s511
                  %s514 = smul.u32 %s513, 16
                  %s515 = smul.u32 %s513, 16
                  %s516 = scalar_lea.vmem %s311, %s514 [#allocation8]
                  %s517 = scalar_lea.vmem %s439, %s515
                $region127: #{tpu_custom_call.1} parent=121 // loop_footer
                  %s501 = sadd.s32 %s499, 1
                $region128: #{tpu_custom_call.1} parent=121 // loop_footer_branch
                  %498 = sbr.rel target = $region124
                $region129: #{tpu_custom_call.1} parent=121 // loop_exit
                  _
                %s518 = sshrl.u32 %s435, 1
                %s519 = sand.u32 %s435, 1
                %s520 = smul.u32 %s518, 2
                %s521 = smul.u32 8, %s520
                %s522 = scalar_lea.vmem %s311, %s521 [#allocation8]
                %s523 = smul.u32 8, %s520
                %s524 = scalar_lea.vmem %s439, %s523
                // While loop
                $region130: #{tpu_custom_call.1} parent=121 // loop_pre_header
                  _
                $region131: #{tpu_custom_call.1} parent=121 // loop_header
                  %s526 = sphi 0, %s528
                  %p527 = scmp.ge.s32.totalorder %s526, %s519
                  %s531 = sphi 0, %s538
                  %s532 = sphi %s522, %s541
                  %s533 = sphi %s524, %s542
                $region132: #{tpu_custom_call.1} parent=121 // loop_header_branch
                  %530 = sbr.rel (%p527) target = $region136
                $region133: #{tpu_custom_call.1} parent=121 // loop_body
                  %v534 = vld [vmem:[%s532] sm:$0xff]
                  %535 = vst [vmem:[%s533] sm:$0xff] %v534
                  %s536 = sadd.s32 1, %s531
                  %p537 = scmp.ge.s32.totalorder %s536, %s519
                  %s538 = scalar_select %p537, 0, %s536
                  %s539 = smul.u32 %s538, 8
                  %s540 = smul.u32 %s538, 8
                  %s541 = scalar_lea.vmem %s522, %s539 [#allocation8]
                  %s542 = scalar_lea.vmem %s524, %s540
                $region134: #{tpu_custom_call.1} parent=121 // loop_footer
                  %s528 = sadd.s32 %s526, 1
                $region135: #{tpu_custom_call.1} parent=121 // loop_footer_branch
                  %525 = sbr.rel target = $region131
                $region136: #{tpu_custom_call.1} parent=121 // loop_exit
                  _
              $region122: #{tpu_custom_call.1} parent=99 // pred_fallthru
                _
              // Predicated region
              $region137: #{tpu_custom_call.1} parent=99 // pred_check
                _
              $region138: #{tpu_custom_call.1} parent=99 // pred_check_branch
                %544 = sbr.rel target = $region140
              $region139: #{tpu_custom_call.1} parent=99 // pred_region
                _
              $region140: #{tpu_custom_call.1} parent=99 // pred_fallthru
                _
            $region100: #{tpu_custom_call.1} parent=95 // pred_fallthru
              _
            // Predicated region
            $region101: #{tpu_custom_call.1} parent=95 // pred_check
              _
            $region102: #{tpu_custom_call.1} parent=95 // pred_check_branch
              %446 = sbr.rel target = $region104
            $region103: #{tpu_custom_call.1} parent=95 // pred_region
              %s448 = ssub.s32 256, 1
              %s449 = sshrl.u32 %s435, 1
              // While loop
              $region105: #{tpu_custom_call.1} parent=103 // loop_pre_header
                _
              $region106: #{tpu_custom_call.1} parent=103 // loop_header
                %s451 = sphi 0, %s453
                %p452 = scmp.ge.s32.totalorder %s451, %s449
                %s456 = sphi 0, %s465
                %s457 = sphi %s311, %s468
                %s458 = sphi %s439, %s469
              $region107: #{tpu_custom_call.1} parent=103 // loop_header_branch
                %455 = sbr.rel (%p452) target = $region111
              $region108: #{tpu_custom_call.1} parent=103 // loop_body
                %v459 = vld [vmem:[%s457] sm:%s448]
                %460 = vst [vmem:[%s458] sm:%s448] %v459
                %v461 = vld [vmem:[%s457 + $0x8] sm:%s448]
                %462 = vst [vmem:[%s458 + $0x8] sm:%s448] %v461
                %s463 = sadd.s32 1, %s456
                %p464 = scmp.ge.s32.totalorder %s463, %s449
                %s465 = scalar_select %p464, 0, %s463
                %s466 = smul.u32 %s465, 16
                %s467 = smul.u32 %s465, 16
                %s468 = scalar_lea.vmem %s311, %s466 [#allocation8]
                %s469 = scalar_lea.vmem %s439, %s467
              $region109: #{tpu_custom_call.1} parent=103 // loop_footer
                %s453 = sadd.s32 %s451, 1
              $region110: #{tpu_custom_call.1} parent=103 // loop_footer_branch
                %450 = sbr.rel target = $region106
              $region111: #{tpu_custom_call.1} parent=103 // loop_exit
                _
              %s470 = sshrl.u32 %s435, 1
              %s471 = sand.u32 %s435, 1
              %s472 = smul.u32 %s470, 2
              %s473 = smul.u32 8, %s472
              %s474 = scalar_lea.vmem %s311, %s473 [#allocation8]
              %s475 = smul.u32 8, %s472
              %s476 = scalar_lea.vmem %s439, %s475
              // While loop
              $region112: #{tpu_custom_call.1} parent=103 // loop_pre_header
                _
              $region113: #{tpu_custom_call.1} parent=103 // loop_header
                %s478 = sphi 0, %s480
                %p479 = scmp.ge.s32.totalorder %s478, %s471
                %s483 = sphi 0, %s490
                %s484 = sphi %s474, %s493
                %s485 = sphi %s476, %s494
              $region114: #{tpu_custom_call.1} parent=103 // loop_header_branch
                %482 = sbr.rel (%p479) target = $region118
              $region115: #{tpu_custom_call.1} parent=103 // loop_body
                %v486 = vld [vmem:[%s484] sm:%s448]
                %487 = vst [vmem:[%s485] sm:%s448] %v486
                %s488 = sadd.s32 1, %s483
                %p489 = scmp.ge.s32.totalorder %s488, %s471
                %s490 = scalar_select %p489, 0, %s488
                %s491 = smul.u32 %s490, 8
                %s492 = smul.u32 %s490, 8
                %s493 = scalar_lea.vmem %s474, %s491 [#allocation8]
                %s494 = scalar_lea.vmem %s476, %s492
              $region116: #{tpu_custom_call.1} parent=103 // loop_footer
                %s480 = sadd.s32 %s478, 1
              $region117: #{tpu_custom_call.1} parent=103 // loop_footer_branch
                %477 = sbr.rel target = $region113
              $region118: #{tpu_custom_call.1} parent=103 // loop_exit
                _
            $region104: #{tpu_custom_call.1} parent=95 // pred_fallthru
              _
          $region96: #{tpu_custom_call.1} parent=91 // pred_fallthru
            _
          %545 = vnop
        $region92: #{tpu_custom_call.1} parent=23 // pred_fallthru
          _
      $region24: #{tpu_custom_call.1} parent=5 // pred_fallthru
        _
      %p546 = scmp.le.s32.totalorder 2, %s12
      // Predicated region
      $region141: #{tpu_custom_call.1} parent=5 // pred_check
        %p547 = pneg %p546
      $region142: #{tpu_custom_call.1} parent=5 // pred_check_branch
        %549 = sbr.rel (%p547) target = $region144
      $region143: #{tpu_custom_call.1} parent=5 // pred_region
        %s550 = ssub.s32 %s12, 2
        // Predicated region
        $region145: #{tpu_custom_call.1} parent=143 // pred_check
          %p551 = pneg %p81
        $region146: #{tpu_custom_call.1} parent=143 // pred_check_branch
          %553 = sbr.rel (%p551) target = $region148
        $region147: #{tpu_custom_call.1} parent=143 // pred_region
          %s554 = sand.u32 %s66, 1
          %s555 = sand.u32 %s66, 1
          %s556 = smul.addr %s555, 16
          %s557 = scalar_lea.vmem [#allocation7], %s556
        $region148: #{tpu_custom_call.1} parent=143 // pred_fallthru
          _
        // Predicated region
        $region149: #{tpu_custom_call.1} parent=143 // pred_check
          %p558 = pneg %p107
        $region150: #{tpu_custom_call.1} parent=143 // pred_check_branch
          %560 = sbr.rel (%p558) target = $region152
        $region151: #{tpu_custom_call.1} parent=143 // pred_region
          %s561 = sand.u32 %s92, 1
          %s562 = sand.u32 %s92, 1
          %s563 = smul.addr %s562, 16
          %s564 = scalar_lea.vmem [#allocation8], %s563
        $region152: #{tpu_custom_call.1} parent=143 // pred_fallthru
          _
      $region144: #{tpu_custom_call.1} parent=5 // pred_fallthru
        _
    $region6: #{tpu_custom_call.1} parent=1 // loop_footer
      %s16 = sadd.s32 1, %s12
    $region7: #{tpu_custom_call.1} parent=1 // loop_footer_branch
      %11 = sbr.rel target = $region3
    $region8: #{tpu_custom_call.1} parent=1 // loop_exit
      _
    %565 = vsyncpa [#allocation6], 1
    %s566 = scalar_lea.sflag [#allocation6], 1
    %567 = vsyncpa %s566, 1

</llo_original>
